<compile_context>
chip_gen: v7x
topology: tpu7x:2x2x1
jax: 0.10.0
libtpu: 0.0.40
codegen_flags: <defaults>
</compile_context>

<pallas_src>
import functools

import jax
import jax.numpy as jnp
import numpy as np
from jax.experimental import pallas as pl
from jax.experimental.pallas import tpu as pltpu


def _round_up(x, m):
    return ((x + m - 1) // m) * m


# --------------------------------------------------------------------------- #
# Kernel: one MXU dot (pool + bn20 + fc + bn21 folded into w/b) + log-softmax.
# --------------------------------------------------------------------------- #
def head_kernel(x_ref, w_ref, b_ref, o_ref):
    # x_ref: [TN, C*H*W]   batch tile (compute dtype)
    # w_ref: [C*H*W, Kp]   effective weight, lane-padded to Kp (compute dtype)
    # b_ref: [1, Kp]       effective bias (f32); padded lanes = -1e30
    # o_ref: [TN, Kp]      log-probabilities, lane-dense f32 store
    z = jnp.dot(x_ref[...], w_ref[...], preferred_element_type=jnp.float32)
    z = z + b_ref[...]

    # log-softmax over the class axis; padded lanes carry -1e30 so exp() -> 0.
    m = jnp.max(z, axis=-1, keepdims=True)
    zs = z - m
    lse = jnp.log(jnp.sum(jnp.exp(zs), axis=-1, keepdims=True))
    o_ref[...] = (zs - lse).astype(o_ref.dtype)


# --------------------------------------------------------------------------- #
# One-time (frozen model) parameter folding: avgpool + bn20 + fc + bn21.
# --------------------------------------------------------------------------- #
def fold_head_params(params, H, W, *, eps=1e-5, compute_dtype=jnp.float32):
    """Returns (w_pad [CHW, Kp], b_pad [1, Kp]) for eval-mode BN."""
    K, C = params["fc_w"].shape
    HW = H * W

    s20 = params["bn20_gamma"] / jnp.sqrt(params["bn20_var"] + eps)
    b20 = params["bn20_beta"] - params["bn20_mean"] * s20
    s21 = params["bn21_gamma"] / jnp.sqrt(params["bn21_var"] + eps)
    b21 = params["bn21_beta"] - params["bn21_mean"] * s21

    wT = params["fc_w"].T                                   # [C, K]
    w_eff = (s20[:, None] * wT) * s21[None, :]              # [C, K]
    b_eff = (b20 @ wT) * s21 + params["fc_b"] * s21 + b21   # [K]

    # Fold avgpool (mean over HW) into the weight: x_flat[n, c*HW + s].
    w_exp = jnp.repeat(w_eff / HW, HW, axis=0)              # [C*HW, K]

    # Lane-dense class axis: pad K -> Kp (multiple of 128); masked pad lanes.
    Kp = _round_up(K, 128)
    w_pad = jnp.pad(w_exp, ((0, 0), (0, Kp - K))).astype(compute_dtype)
    b_pad = jnp.pad(b_eff.reshape(1, K).astype(jnp.float32),
                    ((0, 0), (0, Kp - K)), constant_values=-1e30)
    return w_pad, b_pad


# --------------------------------------------------------------------------- #
# Forward: single pallas_call over a batch grid.
# --------------------------------------------------------------------------- #
@functools.partial(jax.jit, static_argnames=("num_classes", "tn"))
def resnet_head_forward(x, w_pad, b_pad, *, num_classes, tn=1024):
    """x: [N, C, H, W]. Returns log-probabilities [N, num_classes] (f32)."""
    N, C, H, W = x.shape
    CHW = C * H * W
    Kp = w_pad.shape[1]
    dtype = w_pad.dtype
    itemsize = jnp.dtype(dtype).itemsize
    sub = 16 if itemsize == 2 else 8               # sublane packing per dtype

    # ---- batch tiling -------------------------------------------------------
    # Cap TN so double-buffered x tiles + resident w/b + double-buffered out
    # fit well inside v7x's 64 MiB/TC VMEM (leaves compiler scratch headroom).
    fixed_bytes = CHW * Kp * itemsize + Kp * 4           # single-buffered w / b
    per_row_bytes = 2 * CHW * itemsize + 2 * Kp * 4      # 2x x-row + 2x out-row
    budget = 40 << 20
    tn_cap = max((budget - fixed_bytes) // per_row_bytes, sub)
    tn_cap = (tn_cap // sub) * sub
    tn_eff = min(tn, tn_cap)

    # Balanced tiles; force >= 2 grid steps once N is big enough so both v7x
    # TensorCores get work (dimension_semantics=("parallel",)).
    n_tiles = pl.cdiv(N, tn_eff)
    if N >= 2 * sub:
        n_tiles = max(n_tiles, 2)
    TN = _round_up(pl.cdiv(N, n_tiles), sub)
    N_pad = n_tiles * TN

    x_flat = x.reshape(N, CHW)
    if x_flat.dtype != dtype:
        # TODO(synk): if the upstream ResNet body already emits `dtype` (e.g.
        # bf16), pass it through and this extra-HBM-round-trip cast disappears.
        x_flat = x_flat.astype(dtype)
    if N_pad != N:
        x_flat = jnp.pad(x_flat, ((0, N_pad - N), (0, 0)))

    vmem_bytes = fixed_bytes + TN * per_row_bytes
    vmem_limit = int(min(max(vmem_bytes + (2 << 20), 16 << 20), 48 << 20))

    cost = pl.CostEstimate(
        flops=2 * N_pad * CHW * Kp,
        transcendentals=N_pad * Kp,
        bytes_accessed=(N_pad * CHW * itemsize + CHW * Kp * itemsize
                        + Kp * 4 + N_pad * Kp * 4),
    )

    out = pl.pallas_call(
        head_kernel,
        out_shape=jax.ShapeDtypeStruct((N_pad, Kp), jnp.float32),
        grid_spec=pltpu.PrefetchScalarGridSpec(
            num_scalar_prefetch=0,
            grid=(n_tiles,),
            in_specs=[
                pl.BlockSpec((TN, CHW), lambda i: (i, 0)),
                # Grid-invariant operands: single-buffered (no wasted VMEM/DMA).
                pl.BlockSpec((CHW, Kp), lambda i: (0, 0),
                             pipeline_mode=pl.Buffered(1)),
                pl.BlockSpec((1, Kp), lambda i: (0, 0),
                             pipeline_mode=pl.Buffered(1)),
            ],
            out_specs=pl.BlockSpec((TN, Kp), lambda i: (i, 0)),
        ),
        compiler_params=pltpu.CompilerParams(
            dimension_semantics=("parallel",),
            vmem_limit_bytes=vmem_limit,
        ),
        cost_estimate=cost,
    )(x_flat, w_pad, b_pad)

    return out[:N, :num_classes]


# --------------------------------------------------------------------------- #
# Test scaffolding
# --------------------------------------------------------------------------- #
def make_params(key, C, K):
    ks = jax.random.split(key, 8)
    return {
        # bn20: BatchNorm1d(C)
        "bn20_gamma": jax.random.uniform(ks[0], (C,), jnp.float32, 0.5, 1.5),
        "bn20_beta": jax.random.normal(ks[1], (C,), jnp.float32) * 0.1,
        "bn20_mean": jax.random.normal(ks[2], (C,), jnp.float32) * 0.1,
        "bn20_var": jax.random.uniform(ks[3], (C,), jnp.float32, 0.5, 1.5),
        # fc: Linear(C, K)
        "fc_w": jax.random.normal(ks[4], (K, C), jnp.float32) * 0.1,
        "fc_b": jax.random.normal(ks[5], (K,), jnp.float32) * 0.1,
        # bn21: BatchNorm1d(K)
        "bn21_gamma": jax.random.uniform(ks[6], (K,), jnp.float32, 0.5, 1.5),
        "bn21_beta": jax.random.normal(ks[7], (K,), jnp.float32) * 0.1,
        "bn21_mean": jnp.zeros((K,), jnp.float32),
        "bn21_var": jnp.ones((K,), jnp.float32),
    }


def reference_forward(x, params):
    """Pure-JAX reference mirroring the PyTorch forward (eval-mode BN)."""
    eps = 1e-5
    pooled = jnp.mean(x, axis=(2, 3))                                   # avgpool + view
    h = (pooled - params["bn20_mean"]) / jnp.sqrt(params["bn20_var"] + eps)
    h = h * params["bn20_gamma"] + params["bn20_beta"]                  # bn20
    z = h @ params["fc_w"].T + params["fc_b"]                           # fc
    z = (z - params["bn21_mean"]) / jnp.sqrt(params["bn21_var"] + eps)
    z = z * params["bn21_gamma"] + params["bn21_beta"]                  # bn21
    return jax.nn.log_softmax(z, axis=1)                                # logsoftmax


if __name__ == "__main__":
    N, C, H, W, K = 2, 16, 8, 8, 10  # small shapes consistent with a ResNet20 head
    key = jax.random.PRNGKey(0)
    kx, kp = jax.random.split(key)
    x = jax.random.normal(kx, (N, C, H, W), jnp.float32)
    params = make_params(kp, C, K)

    # One-time parameter folding (hoisted out of the jitted forward).
    w_pad, b_pad = jax.block_until_ready(fold_head_params(params, H, W))

    # f32 path, single tile.
    out = jax.block_until_ready(resnet_head_forward(x, w_pad, b_pad, num_classes=K))
    ref = reference_forward(x, params)
    np.testing.assert_allclose(np.asarray(out), np.asarray(ref), rtol=1e-4, atol=1e-5)

    # f32 path, multi-tile (balanced tiles, 2 grid steps -> both v7x cores).
    x_big = jax.random.normal(jax.random.PRNGKey(1), (20, C, H, W), jnp.float32)
    out_big = jax.block_until_ready(
        resnet_head_forward(x_big, w_pad, b_pad, num_classes=K))
    ref_big = reference_forward(x_big, params)
    np.testing.assert_allclose(np.asarray(out_big), np.asarray(ref_big),
                               rtol=1e-4, atol=1e-5)

    # bf16 activations/weights (v5e MXU relief, halved HBM x read); f32 accum.
    w_bf, b_bf = jax.block_until_ready(
        fold_head_params(params, H, W, compute_dtype=jnp.bfloat16))
    out_bf = jax.block_until_ready(
        resnet_head_forward(x.astype(jnp.bfloat16), w_bf, b_bf, num_classes=K))
    np.testing.assert_allclose(np.asarray(out_bf), np.asarray(ref),
                               rtol=1e-1, atol=1e-1)

    print("KERNEL_OK")
</pallas_src>

<mosaic_0001>
module attributes {stable_mosaic.version = 11 : i64} {
  func.func @head_kernel(%arg0: i32, %arg1: memref<8x1024xf32, #tpu.memory_space<vmem>>, %arg2: memref<1024x128xf32, #tpu.memory_space<vmem>>, %arg3: memref<1x128xf32, #tpu.memory_space<vmem>>, %arg4: memref<8x128xf32, #tpu.memory_space<vmem>>) attributes {dimension_semantics = [#tpu.dimension_semantics<parallel>], iteration_bounds = array<i64: 1>, scalar_prefetch = 0 : i64, scratch_operands = 0 : i64, tpu.core_type = #tpu.core_type<tc>, window_params = [{transform_indices = @transform_0, window_bounds = array<i64: 8, 1024>}, {pipeline_mode = #tpu.pipeline_mode<synchronous>, transform_indices = @transform_1, window_bounds = array<i64: 1024, 128>}, {pipeline_mode = #tpu.pipeline_mode<synchronous>, transform_indices = @transform_2, window_bounds = array<i64: 1, 128>}, {transform_indices = @transform_3, window_bounds = array<i64: 8, 128>}]} {
    %c0 = arith.constant 0 : index
    %c0_0 = arith.constant 0 : index
    %0 = vector.load %arg1[%c0, %c0_0] : memref<8x1024xf32, #tpu.memory_space<vmem>>, vector<8x1024xf32>
    %c0_1 = arith.constant 0 : index
    %c0_2 = arith.constant 0 : index
    %1 = vector.load %arg2[%c0_1, %c0_2] : memref<1024x128xf32, #tpu.memory_space<vmem>>, vector<1024x128xf32>
    %cst = arith.constant dense<0.000000e+00> : vector<8x128xf32>
    %2 = tpu.matmul %0, %1, %cst {dimension_numbers = #tpu.dot_dimension_numbers<[1], [0], [0], [1], [0, 0, 1, 1], [], []>} : vector<8x1024xf32>, vector<1024x128xf32>, vector<8x128xf32> -> vector<8x128xf32>
    %c0_3 = arith.constant 0 : index
    %c0_4 = arith.constant 0 : index
    %3 = vector.load %arg3[%c0_3, %c0_4] : memref<1x128xf32, #tpu.memory_space<vmem>>, vector<1x128xf32>
    %4 = vector.broadcast %3 : vector<1x128xf32> to vector<8x128xf32>
    %5 = arith.addf %2, %4 : vector<8x128xf32>
    %cst_5 = arith.constant dense<0xFF800000> : vector<8xf32>
    %6 = vector.multi_reduction <maximumf>, %5, %cst_5 [1] : vector<8x128xf32> to vector<8xf32>
    %7 = vector.shape_cast %6 : vector<8xf32> to vector<8x1xf32>
    %8 = vector.broadcast %7 : vector<8x1xf32> to vector<8x128xf32>
    %9 = arith.subf %5, %8 : vector<8x128xf32>
    %10 = math.exp %9 : vector<8x128xf32>
    %cst_6 = arith.constant dense<0.000000e+00> : vector<8xf32>
    %11 = vector.multi_reduction <add>, %10, %cst_6 [1] : vector<8x128xf32> to vector<8xf32>
    %12 = vector.shape_cast %11 : vector<8xf32> to vector<8x1xf32>
    %13 = math.log %12 : vector<8x1xf32>
    %14 = vector.broadcast %13 : vector<8x1xf32> to vector<8x128xf32>
    %15 = arith.subf %9, %14 : vector<8x128xf32>
    %c0_7 = arith.constant 0 : index
    %c0_8 = arith.constant 0 : index
    %16 = vector.load %arg4[%c0_7, %c0_8] : memref<8x128xf32, #tpu.memory_space<vmem>>, vector<8x128xf32>
    tpu.vector_store %arg4[%c0_7, %c0_8], %15 {strides = array<i32>} : memref<8x128xf32, #tpu.memory_space<vmem>>, vector<8x128xf32>,
    return
  }
  func.func @transform_0(%arg0: i32) -> (i32, i32) {
    %c0_i32 = arith.constant 0 : i32
    %c0_i32_0 = arith.constant 0 : i32
    return %arg0, %c0_i32 : i32, i32
  }
  func.func @transform_1(%arg0: i32) -> (i32, i32) {
    %c0_i32 = arith.constant 0 : i32
    %c0_i32_0 = arith.constant 0 : i32
    %c0_i32_1 = arith.constant 0 : i32
    return %c0_i32, %c0_i32_0 : i32, i32
  }
  func.func @transform_2(%arg0: i32) -> (i32, i32) {
    %c0_i32 = arith.constant 0 : i32
    %c0_i32_0 = arith.constant 0 : i32
    %c0_i32_1 = arith.constant 0 : i32
    return %c0_i32, %c0_i32_0 : i32, i32
  }
  func.func @transform_3(%arg0: i32) -> (i32, i32) {
    %c0_i32 = arith.constant 0 : i32
    %c0_i32_0 = arith.constant 0 : i32
    return %arg0, %c0_i32 : i32, i32
  }
}

</mosaic_0001>

<llo_original>
// kernel: resnet_head_forward.1
$region0: #{resnet_head_forward.1}
  #allocation0 [shape = 'u32[]', space=smem, size = 0x4, offset = 0x4, fixed_abs, tag = 'smem constant byte address 0x4 - core index']
  #allocation1 [shape = 'u32[144,128]{1,0:T(1,128)}', space=vmem, size = 0x12000, scoped, tag = 'internal scratch']
  %s0 = inlined_call_operand.vmem [shape: f32[8,1024], index: 0, kind: input, shape index: {}]
  %s1 = inlined_call_operand.hbm [shape: f32[1024,128], index: 1, kind: input, shape index: {}]
  %s2 = inlined_call_operand.vmem [shape: f32[1,128], index: 2, kind: input, shape index: {}]
  %s3 = inlined_call_operand.vmem [shape: f32[8,128], index: 3, kind: output, shape index: {}]
  %s4 = sld [smem:[#allocation0]]
  $region26: #{resnet_head_forward.1} parent=0
    _
  %s6 = ssub.s32 1, %s4
  %s7 = scalar_select 0, %s6, %s4
  $region1: #{resnet_head_forward.1} parent=0
    #allocation2 [shape = 'u8[524288]{0}', space=vmem, size = 0x80000, scoped, tag = 'input window, operand 1, single buffered']
    #allocation3 [shape = 's32[1]{0}', space=sflag, size = 0x4, scoped, tag = 'scoped memory for resnet_head_forward.1']
    %8 = vsyncpa [#allocation3], 0
    // Predicated region
    $region2: #{resnet_head_forward.1} parent=1 // pred_check
      _
    $region3: #{resnet_head_forward.1} parent=1 // pred_check_branch
      %10 = sbr.rel (0) target = $region5
    $region4: #{resnet_head_forward.1} parent=1 // pred_region
      _
    $region5: #{resnet_head_forward.1} parent=1 // pred_fallthru
      _
    // Predicated region
    $region6: #{resnet_head_forward.1} parent=1 // pred_check
      _
    $region7: #{resnet_head_forward.1} parent=1 // pred_check_branch
      %12 = sbr.rel (0) target = $region9
    $region8: #{resnet_head_forward.1} parent=1 // pred_region
      %s14 = ssub.s32 16384, 16384
      %15 = vsyncadd [#allocation3], %s14
      %s16 = sshll.u32 [#allocation2], 4
      %s17 = int_to_ptr.vmem [resolvable:$true] %s16
      %22 = dma.hbm_to_vmem [thread:$0]  %s1, 16384, %s17, [#allocation3], 128, 128, 8
    $region9: #{resnet_head_forward.1} parent=1 // pred_fallthru
      _
    // Predicated region
    $region10: #{resnet_head_forward.1} parent=1 // pred_check
      _
    $region11: #{resnet_head_forward.1} parent=1 // pred_check_branch
      %24 = sbr.rel (0) target = $region13
    $region12: #{resnet_head_forward.1} parent=1 // pred_region
      _
    $region13: #{resnet_head_forward.1} parent=1 // pred_fallthru
      _
    // Predicated region
    $region14: #{resnet_head_forward.1} parent=1 // pred_check
      _
    $region15: #{resnet_head_forward.1} parent=1 // pred_check_branch
      %26 = sbr.rel (0) target = $region17
    $region16: #{resnet_head_forward.1} parent=1 // pred_region
      %27 = dma.done [#allocation3], 16384
    $region17: #{resnet_head_forward.1} parent=1 // pred_fallthru
      _
    %v28 = vld [vmem:[%s0] sm:$0xff]
    %v29 = vld [vmem:[%s0 + $0x8] sm:$0xff]
    %v30 = vld [vmem:[%s0 + $0x10] sm:$0xff]
    %v31 = vld [vmem:[%s0 + $0x18] sm:$0xff]
    %v32 = vld [vmem:[%s0 + $0x20] sm:$0xff]
    %v33 = vld [vmem:[%s0 + $0x28] sm:$0xff]
    %v34 = vld [vmem:[%s0 + $0x30] sm:$0xff]
    %v35 = vld [vmem:[%s0 + $0x38] sm:$0xff]
    %v36 = vld [vmem:[#allocation2] sm:$0xff]
    %v37 = vld [vmem:[#allocation2 + $0x8] sm:$0xff]
    %v38 = vld [vmem:[#allocation2 + $0x10] sm:$0xff]
    %v39 = vld [vmem:[#allocation2 + $0x18] sm:$0xff]
    %v40 = vld [vmem:[#allocation2 + $0x20] sm:$0xff]
    %v41 = vld [vmem:[#allocation2 + $0x28] sm:$0xff]
    %v42 = vld [vmem:[#allocation2 + $0x30] sm:$0xff]
    %v43 = vld [vmem:[#allocation2 + $0x38] sm:$0xff]
    %v44 = vld [vmem:[#allocation2 + $0x40] sm:$0xff]
    %v45 = vld [vmem:[#allocation2 + $0x48] sm:$0xff]
    %v46 = vld [vmem:[#allocation2 + $0x50] sm:$0xff]
    %v47 = vld [vmem:[#allocation2 + $0x58] sm:$0xff]
    %v48 = vld [vmem:[#allocation2 + $0x60] sm:$0xff]
    %v49 = vld [vmem:[#allocation2 + $0x68] sm:$0xff]
    %v50 = vld [vmem:[#allocation2 + $0x70] sm:$0xff]
    %v51 = vld [vmem:[#allocation2 + $0x78] sm:$0xff]
    %v52 = vld [vmem:[#allocation2 + $0x80] sm:$0xff]
    %v53 = vld [vmem:[#allocation2 + $0x88] sm:$0xff]
    %v54 = vld [vmem:[#allocation2 + $0x90] sm:$0xff]
    %v55 = vld [vmem:[#allocation2 + $0x98] sm:$0xff]
    %v56 = vld [vmem:[#allocation2 + $0xa0] sm:$0xff]
    %v57 = vld [vmem:[#allocation2 + $0xa8] sm:$0xff]
    %v58 = vld [vmem:[#allocation2 + $0xb0] sm:$0xff]
    %v59 = vld [vmem:[#allocation2 + $0xb8] sm:$0xff]
    %v60 = vld [vmem:[#allocation2 + $0xc0] sm:$0xff]
    %v61 = vld [vmem:[#allocation2 + $0xc8] sm:$0xff]
    %v62 = vld [vmem:[#allocation2 + $0xd0] sm:$0xff]
    %v63 = vld [vmem:[#allocation2 + $0xd8] sm:$0xff]
    %v64 = vld [vmem:[#allocation2 + $0xe0] sm:$0xff]
    %v65 = vld [vmem:[#allocation2 + $0xe8] sm:$0xff]
    %v66 = vld [vmem:[#allocation2 + $0xf0] sm:$0xff]
    %v67 = vld [vmem:[#allocation2 + $0xf8] sm:$0xff]
    %v68 = vld [vmem:[#allocation2 + $0x100] sm:$0xff]
    %v69 = vld [vmem:[#allocation2 + $0x108] sm:$0xff]
    %v70 = vld [vmem:[#allocation2 + $0x110] sm:$0xff]
    %v71 = vld [vmem:[#allocation2 + $0x118] sm:$0xff]
    %v72 = vld [vmem:[#allocation2 + $0x120] sm:$0xff]
    %v73 = vld [vmem:[#allocation2 + $0x128] sm:$0xff]
    %v74 = vld [vmem:[#allocation2 + $0x130] sm:$0xff]
    %v75 = vld [vmem:[#allocation2 + $0x138] sm:$0xff]
    %v76 = vld [vmem:[#allocation2 + $0x140] sm:$0xff]
    %v77 = vld [vmem:[#allocation2 + $0x148] sm:$0xff]
    %v78 = vld [vmem:[#allocation2 + $0x150] sm:$0xff]
    %v79 = vld [vmem:[#allocation2 + $0x158] sm:$0xff]
    %v80 = vld [vmem:[#allocation2 + $0x160] sm:$0xff]
    %v81 = vld [vmem:[#allocation2 + $0x168] sm:$0xff]
    %v82 = vld [vmem:[#allocation2 + $0x170] sm:$0xff]
    %v83 = vld [vmem:[#allocation2 + $0x178] sm:$0xff]
    %v84 = vld [vmem:[#allocation2 + $0x180] sm:$0xff]
    %v85 = vld [vmem:[#allocation2 + $0x188] sm:$0xff]
    %v86 = vld [vmem:[#allocation2 + $0x190] sm:$0xff]
    %v87 = vld [vmem:[#allocation2 + $0x198] sm:$0xff]
    %v88 = vld [vmem:[#allocation2 + $0x1a0] sm:$0xff]
    %v89 = vld [vmem:[#allocation2 + $0x1a8] sm:$0xff]
    %v90 = vld [vmem:[#allocation2 + $0x1b0] sm:$0xff]
    %v91 = vld [vmem:[#allocation2 + $0x1b8] sm:$0xff]
    %v92 = vld [vmem:[#allocation2 + $0x1c0] sm:$0xff]
    %v93 = vld [vmem:[#allocation2 + $0x1c8] sm:$0xff]
    %v94 = vld [vmem:[#allocation2 + $0x1d0] sm:$0xff]
    %v95 = vld [vmem:[#allocation2 + $0x1d8] sm:$0xff]
    %v96 = vld [vmem:[#allocation2 + $0x1e0] sm:$0xff]
    %v97 = vld [vmem:[#allocation2 + $0x1e8] sm:$0xff]
    %v98 = vld [vmem:[#allocation2 + $0x1f0] sm:$0xff]
    %v99 = vld [vmem:[#allocation2 + $0x1f8] sm:$0xff]
    %v100 = vld [vmem:[#allocation2 + $0x200] sm:$0xff]
    %v101 = vld [vmem:[#allocation2 + $0x208] sm:$0xff]
    %v102 = vld [vmem:[#allocation2 + $0x210] sm:$0xff]
    %v103 = vld [vmem:[#allocation2 + $0x218] sm:$0xff]
    %v104 = vld [vmem:[#allocation2 + $0x220] sm:$0xff]
    %v105 = vld [vmem:[#allocation2 + $0x228] sm:$0xff]
    %v106 = vld [vmem:[#allocation2 + $0x230] sm:$0xff]
    %v107 = vld [vmem:[#allocation2 + $0x238] sm:$0xff]
    %v108 = vld [vmem:[#allocation2 + $0x240] sm:$0xff]
    %v109 = vld [vmem:[#allocation2 + $0x248] sm:$0xff]
    %v110 = vld [vmem:[#allocation2 + $0x250] sm:$0xff]
    %v111 = vld [vmem:[#allocation2 + $0x258] sm:$0xff]
    %v112 = vld [vmem:[#allocation2 + $0x260] sm:$0xff]
    %v113 = vld [vmem:[#allocation2 + $0x268] sm:$0xff]
    %v114 = vld [vmem:[#allocation2 + $0x270] sm:$0xff]
    %v115 = vld [vmem:[#allocation2 + $0x278] sm:$0xff]
    %v116 = vld [vmem:[#allocation2 + $0x280] sm:$0xff]
    %v117 = vld [vmem:[#allocation2 + $0x288] sm:$0xff]
    %v118 = vld [vmem:[#allocation2 + $0x290] sm:$0xff]
    %v119 = vld [vmem:[#allocation2 + $0x298] sm:$0xff]
    %v120 = vld [vmem:[#allocation2 + $0x2a0] sm:$0xff]
    %v121 = vld [vmem:[#allocation2 + $0x2a8] sm:$0xff]
    %v122 = vld [vmem:[#allocation2 + $0x2b0] sm:$0xff]
    %v123 = vld [vmem:[#allocation2 + $0x2b8] sm:$0xff]
    %v124 = vld [vmem:[#allocation2 + $0x2c0] sm:$0xff]
    %v125 = vld [vmem:[#allocation2 + $0x2c8] sm:$0xff]
    %v126 = vld [vmem:[#allocation2 + $0x2d0] sm:$0xff]
    %v127 = vld [vmem:[#allocation2 + $0x2d8] sm:$0xff]
    %v128 = vld [vmem:[#allocation2 + $0x2e0] sm:$0xff]
    %v129 = vld [vmem:[#allocation2 + $0x2e8] sm:$0xff]
    %v130 = vld [vmem:[#allocation2 + $0x2f0] sm:$0xff]
    %v131 = vld [vmem:[#allocation2 + $0x2f8] sm:$0xff]
    %v132 = vld [vmem:[#allocation2 + $0x300] sm:$0xff]
    %v133 = vld [vmem:[#allocation2 + $0x308] sm:$0xff]
    %v134 = vld [vmem:[#allocation2 + $0x310] sm:$0xff]
    %v135 = vld [vmem:[#allocation2 + $0x318] sm:$0xff]
    %v136 = vld [vmem:[#allocation2 + $0x320] sm:$0xff]
    %v137 = vld [vmem:[#allocation2 + $0x328] sm:$0xff]
    %v138 = vld [vmem:[#allocation2 + $0x330] sm:$0xff]
    %v139 = vld [vmem:[#allocation2 + $0x338] sm:$0xff]
    %v140 = vld [vmem:[#allocation2 + $0x340] sm:$0xff]
    %v141 = vld [vmem:[#allocation2 + $0x348] sm:$0xff]
    %v142 = vld [vmem:[#allocation2 + $0x350] sm:$0xff]
    %v143 = vld [vmem:[#allocation2 + $0x358] sm:$0xff]
    %v144 = vld [vmem:[#allocation2 + $0x360] sm:$0xff]
    %v145 = vld [vmem:[#allocation2 + $0x368] sm:$0xff]
    %v146 = vld [vmem:[#allocation2 + $0x370] sm:$0xff]
    %v147 = vld [vmem:[#allocation2 + $0x378] sm:$0xff]
    %v148 = vld [vmem:[#allocation2 + $0x380] sm:$0xff]
    %v149 = vld [vmem:[#allocation2 + $0x388] sm:$0xff]
    %v150 = vld [vmem:[#allocation2 + $0x390] sm:$0xff]
    %v151 = vld [vmem:[#allocation2 + $0x398] sm:$0xff]
    %v152 = vld [vmem:[#allocation2 + $0x3a0] sm:$0xff]
    %v153 = vld [vmem:[#allocation2 + $0x3a8] sm:$0xff]
    %v154 = vld [vmem:[#allocation2 + $0x3b0] sm:$0xff]
    %v155 = vld [vmem:[#allocation2 + $0x3b8] sm:$0xff]
    %v156 = vld [vmem:[#allocation2 + $0x3c0] sm:$0xff]
    %v157 = vld [vmem:[#allocation2 + $0x3c8] sm:$0xff]
    %v158 = vld [vmem:[#allocation2 + $0x3d0] sm:$0xff]
    %v159 = vld [vmem:[#allocation2 + $0x3d8] sm:$0xff]
    %v160 = vld [vmem:[#allocation2 + $0x3e0] sm:$0xff]
    %v161 = vld [vmem:[#allocation2 + $0x3e8] sm:$0xff]
    %v162 = vld [vmem:[#allocation2 + $0x3f0] sm:$0xff]
    %v163 = vld [vmem:[#allocation2 + $0x3f8] sm:$0xff]
    %v164 = vld [vmem:[%s2] sm:$0x1]
    %v166 = vlaneseq
    %v167 = vshrl.u32 %v166, 7
    %v168 = vsub.s32 0, %v167
    %v169 = vrot.slane %v164, %v168
    %171 = vmatprep.subr.mxu0 0.0
    %172 = vmatpush1.msra.mxu0 %v36
    %173 = vmatprep.subr.mxu0 0.0
    %174 = vmatpush1.msra.mxu0 %v37
    %175 = vmatprep.subr.mxu0 0.0
    %176 = vmatpush1.msra.mxu0 %v38
    %177 = vmatprep.subr.mxu0 0.0
    %178 = vmatpush1.msra.mxu0 %v39
    %179 = vmatprep.subr.mxu0 0.0
    %180 = vmatpush1.msra.mxu0 %v40
    %181 = vmatprep.subr.mxu0 0.0
    %182 = vmatpush1.msra.mxu0 %v41
    %183 = vmatprep.subr.mxu0 0.0
    %184 = vmatpush1.msra.mxu0 %v42
    %185 = vmatprep.subr.mxu0 0.0
    %186 = vmatpush1.msra.mxu0 %v43
    %187 = vmatprep.subr.mxu0 0.0
    %188 = vmatpush1.msra.mxu0 %v44
    %189 = vmatprep.subr.mxu0 0.0
    %190 = vmatpush1.msra.mxu0 %v45
    %191 = vmatprep.subr.mxu0 0.0
    %192 = vmatpush1.msra.mxu0 %v46
    %193 = vmatprep.subr.mxu0 0.0
    %194 = vmatpush1.msra.mxu0 %v47
    %195 = vmatprep.subr.mxu0 0.0
    %196 = vmatpush1.msra.mxu0 %v48
    %197 = vmatprep.subr.mxu0 0.0
    %198 = vmatpush1.msra.mxu0 %v49
    %199 = vmatprep.subr.mxu0 0.0
    %200 = vmatpush1.msra.mxu0 %v50
    %201 = vmatprep.subr.mxu0 0.0
    %202 = vmatpush1.msra.mxu0 %v51
    %203 = vmatprep.subr.mxu0 0.0
    %204 = vmatpush1.msra.mxu0 %v52
    %205 = vmatprep.subr.mxu0 0.0
    %206 = vmatpush1.msra.mxu0 %v53
    %207 = vmatprep.subr.mxu0 0.0
    %208 = vmatpush1.msra.mxu0 %v54
    %209 = vmatprep.subr.mxu0 0.0
    %210 = vmatpush1.msra.mxu0 %v55
    %211 = vmatprep.subr.mxu0 0.0
    %212 = vmatpush1.msra.mxu0 %v56
    %213 = vmatprep.subr.mxu0 0.0
    %214 = vmatpush1.msra.mxu0 %v57
    %215 = vmatprep.subr.mxu0 0.0
    %216 = vmatpush1.msra.mxu0 %v58
    %217 = vmatprep.subr.mxu0 0.0
    %218 = vmatpush1.msra.mxu0 %v59
    %219 = vmatprep.subr.mxu0 0.0
    %220 = vmatpush1.msra.mxu0 %v60
    %221 = vmatprep.subr.mxu0 0.0
    %222 = vmatpush1.msra.mxu0 %v61
    %223 = vmatprep.subr.mxu0 0.0
    %224 = vmatpush1.msra.mxu0 %v62
    %225 = vmatprep.subr.mxu0 0.0
    %226 = vmatpush1.msra.mxu0 %v63
    %227 = vmatprep.subr.mxu0 0.0
    %228 = vmatpush1.msra.mxu0 %v64
    %229 = vmatprep.subr.mxu0 0.0
    %230 = vmatpush1.msra.mxu0 %v65
    %231 = vmatprep.subr.mxu0 0.0
    %232 = vmatpush1.msra.mxu0 %v66
    %233 = vmatprep.subr.mxu0 0.0
    %234 = vmatpush1.msra.mxu0 %v67
    %235 = vmatprep.mubr.f32.mxu0 %v29
    %236 = vmatmul.mubr.f32.gmra.mrb[0].mxu0 %v28
    %v237 = vpop.f32.mrb[0].mxu0
    %v238 = vadd.f32 %v169, %v237
    %v239 = vpop.f32.mrb[0].mxu0
    %240 = vdwg.mxu0
    %241 = vmatprep.subr.mxu0 0.0
    %242 = vmatpush1.msra.mxu0 %v68
    %243 = vmatprep.subr.mxu0 0.0
    %244 = vmatpush1.msra.mxu0 %v69
    %245 = vmatprep.subr.mxu0 0.0
    %246 = vmatpush1.msra.mxu0 %v70
    %247 = vmatprep.subr.mxu0 0.0
    %248 = vmatpush1.msra.mxu0 %v71
    %249 = vmatprep.subr.mxu0 0.0
    %250 = vmatpush1.msra.mxu0 %v72
    %251 = vmatprep.subr.mxu0 0.0
    %252 = vmatpush1.msra.mxu0 %v73
    %253 = vmatprep.subr.mxu0 0.0
    %254 = vmatpush1.msra.mxu0 %v74
    %255 = vmatprep.subr.mxu0 0.0
    %256 = vmatpush1.msra.mxu0 %v75
    %257 = vmatprep.subr.mxu0 0.0
    %258 = vmatpush1.msra.mxu0 %v76
    %259 = vmatprep.subr.mxu0 0.0
    %260 = vmatpush1.msra.mxu0 %v77
    %261 = vmatprep.subr.mxu0 0.0
    %262 = vmatpush1.msra.mxu0 %v78
    %263 = vmatprep.subr.mxu0 0.0
    %264 = vmatpush1.msra.mxu0 %v79
    %265 = vmatprep.subr.mxu0 0.0
    %266 = vmatpush1.msra.mxu0 %v80
    %267 = vmatprep.subr.mxu0 0.0
    %268 = vmatpush1.msra.mxu0 %v81
    %269 = vmatprep.subr.mxu0 0.0
    %270 = vmatpush1.msra.mxu0 %v82
    %271 = vmatprep.subr.mxu0 0.0
    %272 = vmatpush1.msra.mxu0 %v83
    %273 = vmatprep.subr.mxu0 0.0
    %274 = vmatpush1.msra.mxu0 %v84
    %275 = vmatprep.subr.mxu0 0.0
    %276 = vmatpush1.msra.mxu0 %v85
    %277 = vmatprep.subr.mxu0 0.0
    %278 = vmatpush1.msra.mxu0 %v86
    %279 = vmatprep.subr.mxu0 0.0
    %280 = vmatpush1.msra.mxu0 %v87
    %281 = vmatprep.subr.mxu0 0.0
    %282 = vmatpush1.msra.mxu0 %v88
    %283 = vmatprep.subr.mxu0 0.0
    %284 = vmatpush1.msra.mxu0 %v89
    %285 = vmatprep.subr.mxu0 0.0
    %286 = vmatpush1.msra.mxu0 %v90
    %287 = vmatprep.subr.mxu0 0.0
    %288 = vmatpush1.msra.mxu0 %v91
    %289 = vmatprep.subr.mxu0 0.0
    %290 = vmatpush1.msra.mxu0 %v92
    %291 = vmatprep.subr.mxu0 0.0
    %292 = vmatpush1.msra.mxu0 %v93
    %293 = vmatprep.subr.mxu0 0.0
    %294 = vmatpush1.msra.mxu0 %v94
    %295 = vmatprep.subr.mxu0 0.0
    %296 = vmatpush1.msra.mxu0 %v95
    %297 = vmatprep.subr.mxu0 0.0
    %298 = vmatpush1.msra.mxu0 %v96
    %299 = vmatprep.subr.mxu0 0.0
    %300 = vmatpush1.msra.mxu0 %v97
    %301 = vmatprep.subr.mxu0 0.0
    %302 = vmatpush1.msra.mxu0 %v98
    %303 = vmatprep.subr.mxu0 0.0
    %304 = vmatpush1.msra.mxu0 %v99
    %305 = vmatprep.mubr.f32.mxu0 %v31
    %306 = vmatmul.mubr.f32.gmra.mrb[0].mxu0 %v30
    %v307 = vpop.f32.mrb[0].mxu0
    %v308 = vadd.f32 %v238, %v307
    %v309 = vpop.f32.mrb[0].mxu0
    %310 = vdwg.mxu0
    %311 = vmatprep.subr.mxu0 0.0
    %312 = vmatpush1.msra.mxu0 %v100
    %313 = vmatprep.subr.mxu0 0.0
    %314 = vmatpush1.msra.mxu0 %v101
    %315 = vmatprep.subr.mxu0 0.0
    %316 = vmatpush1.msra.mxu0 %v102
    %317 = vmatprep.subr.mxu0 0.0
    %318 = vmatpush1.msra.mxu0 %v103
    %319 = vmatprep.subr.mxu0 0.0
    %320 = vmatpush1.msra.mxu0 %v104
    %321 = vmatprep.subr.mxu0 0.0
    %322 = vmatpush1.msra.mxu0 %v105
    %323 = vmatprep.subr.mxu0 0.0
    %324 = vmatpush1.msra.mxu0 %v106
    %325 = vmatprep.subr.mxu0 0.0
    %326 = vmatpush1.msra.mxu0 %v107
    %327 = vmatprep.subr.mxu0 0.0
    %328 = vmatpush1.msra.mxu0 %v108
    %329 = vmatprep.subr.mxu0 0.0
    %330 = vmatpush1.msra.mxu0 %v109
    %331 = vmatprep.subr.mxu0 0.0
    %332 = vmatpush1.msra.mxu0 %v110
    %333 = vmatprep.subr.mxu0 0.0
    %334 = vmatpush1.msra.mxu0 %v111
    %335 = vmatprep.subr.mxu0 0.0
    %336 = vmatpush1.msra.mxu0 %v112
    %337 = vmatprep.subr.mxu0 0.0
    %338 = vmatpush1.msra.mxu0 %v113
    %339 = vmatprep.subr.mxu0 0.0
    %340 = vmatpush1.msra.mxu0 %v114
    %341 = vmatprep.subr.mxu0 0.0
    %342 = vmatpush1.msra.mxu0 %v115
    %343 = vmatprep.subr.mxu0 0.0
    %344 = vmatpush1.msra.mxu0 %v116
    %345 = vmatprep.subr.mxu0 0.0
    %346 = vmatpush1.msra.mxu0 %v117
    %347 = vmatprep.subr.mxu0 0.0
    %348 = vmatpush1.msra.mxu0 %v118
    %349 = vmatprep.subr.mxu0 0.0
    %350 = vmatpush1.msra.mxu0 %v119
    %351 = vmatprep.subr.mxu0 0.0
    %352 = vmatpush1.msra.mxu0 %v120
    %353 = vmatprep.subr.mxu0 0.0
    %354 = vmatpush1.msra.mxu0 %v121
    %355 = vmatprep.subr.mxu0 0.0
    %356 = vmatpush1.msra.mxu0 %v122
    %357 = vmatprep.subr.mxu0 0.0
    %358 = vmatpush1.msra.mxu0 %v123
    %359 = vmatprep.subr.mxu0 0.0
    %360 = vmatpush1.msra.mxu0 %v124
    %361 = vmatprep.subr.mxu0 0.0
    %362 = vmatpush1.msra.mxu0 %v125
    %363 = vmatprep.subr.mxu0 0.0
    %364 = vmatpush1.msra.mxu0 %v126
    %365 = vmatprep.subr.mxu0 0.0
    %366 = vmatpush1.msra.mxu0 %v127
    %367 = vmatprep.subr.mxu0 0.0
    %368 = vmatpush1.msra.mxu0 %v128
    %369 = vmatprep.subr.mxu0 0.0
    %370 = vmatpush1.msra.mxu0 %v129
    %371 = vmatprep.subr.mxu0 0.0
    %372 = vmatpush1.msra.mxu0 %v130
    %373 = vmatprep.subr.mxu0 0.0
    %374 = vmatpush1.msra.mxu0 %v131
    %375 = vmatprep.mubr.f32.mxu0 %v33
    %376 = vmatmul.mubr.f32.gmra.mrb[0].mxu0 %v32
    %v377 = vpop.f32.mrb[0].mxu0
    %v378 = vadd.f32 %v308, %v377
    %v379 = vpop.f32.mrb[0].mxu0
    %380 = vdwg.mxu0
    %381 = vmatprep.subr.mxu0 0.0
    %382 = vmatpush1.msra.mxu0 %v132
    %383 = vmatprep.subr.mxu0 0.0
    %384 = vmatpush1.msra.mxu0 %v133
    %385 = vmatprep.subr.mxu0 0.0
    %386 = vmatpush1.msra.mxu0 %v134
    %387 = vmatprep.subr.mxu0 0.0
    %388 = vmatpush1.msra.mxu0 %v135
    %389 = vmatprep.subr.mxu0 0.0
    %390 = vmatpush1.msra.mxu0 %v136
    %391 = vmatprep.subr.mxu0 0.0
    %392 = vmatpush1.msra.mxu0 %v137
    %393 = vmatprep.subr.mxu0 0.0
    %394 = vmatpush1.msra.mxu0 %v138
    %395 = vmatprep.subr.mxu0 0.0
    %396 = vmatpush1.msra.mxu0 %v139
    %397 = vmatprep.subr.mxu0 0.0
    %398 = vmatpush1.msra.mxu0 %v140
    %399 = vmatprep.subr.mxu0 0.0
    %400 = vmatpush1.msra.mxu0 %v141
    %401 = vmatprep.subr.mxu0 0.0
    %402 = vmatpush1.msra.mxu0 %v142
    %403 = vmatprep.subr.mxu0 0.0
    %404 = vmatpush1.msra.mxu0 %v143
    %405 = vmatprep.subr.mxu0 0.0
    %406 = vmatpush1.msra.mxu0 %v144
    %407 = vmatprep.subr.mxu0 0.0
    %408 = vmatpush1.msra.mxu0 %v145
    %409 = vmatprep.subr.mxu0 0.0
    %410 = vmatpush1.msra.mxu0 %v146
    %411 = vmatprep.subr.mxu0 0.0
    %412 = vmatpush1.msra.mxu0 %v147
    %413 = vmatprep.subr.mxu0 0.0
    %414 = vmatpush1.msra.mxu0 %v148
    %415 = vmatprep.subr.mxu0 0.0
    %416 = vmatpush1.msra.mxu0 %v149
    %417 = vmatprep.subr.mxu0 0.0
    %418 = vmatpush1.msra.mxu0 %v150
    %419 = vmatprep.subr.mxu0 0.0
    %420 = vmatpush1.msra.mxu0 %v151
    %421 = vmatprep.subr.mxu0 0.0
    %422 = vmatpush1.msra.mxu0 %v152
    %423 = vmatprep.subr.mxu0 0.0
    %424 = vmatpush1.msra.mxu0 %v153
    %425 = vmatprep.subr.mxu0 0.0
    %426 = vmatpush1.msra.mxu0 %v154
    %427 = vmatprep.subr.mxu0 0.0
    %428 = vmatpush1.msra.mxu0 %v155
    %429 = vmatprep.subr.mxu0 0.0
    %430 = vmatpush1.msra.mxu0 %v156
    %431 = vmatprep.subr.mxu0 0.0
    %432 = vmatpush1.msra.mxu0 %v157
    %433 = vmatprep.subr.mxu0 0.0
    %434 = vmatpush1.msra.mxu0 %v158
    %435 = vmatprep.subr.mxu0 0.0
    %436 = vmatpush1.msra.mxu0 %v159
    %437 = vmatprep.subr.mxu0 0.0
    %438 = vmatpush1.msra.mxu0 %v160
    %439 = vmatprep.subr.mxu0 0.0
    %440 = vmatpush1.msra.mxu0 %v161
    %441 = vmatprep.subr.mxu0 0.0
    %442 = vmatpush1.msra.mxu0 %v162
    %443 = vmatprep.subr.mxu0 0.0
    %444 = vmatpush1.msra.mxu0 %v163
    %445 = vmatprep.mubr.f32.mxu0 %v35
    %446 = vmatmul.mubr.f32.gmra.mrb[0].mxu0 %v34
    %v447 = vpop.f32.mrb[0].mxu0
    %v448 = vadd.f32 %v378, %v447
    %v449 = vpop.f32.mrb[0].mxu0
    %450 = vdwg.mxu0
    %451 = vmax.xlane.f32.xlu0 %v448
    %v452 = vpop.xlane.xlu0 %451
    %v453 = vsub.f32 %v448, %v452
    %v454 = vmul.f32 %v453, 1.442695
    %v455 = vpow.pop %v454
    %456 = vadd.xlane.f32.xlu0 %v455
    %v457 = vpop.xlane.xlu0 %456
    %v458 = vlog2.pop %v457
    %v459 = vmul.f32 %v458, 0.6931472
    %v460 = vsub.f32 %v453, %v459
    %461 = vst [vmem:[%s3] sm:$0xff] %v460
    // Predicated region
    $region18: #{resnet_head_forward.1} parent=1 // pred_check
      _
    $region19: #{resnet_head_forward.1} parent=1 // pred_check_branch
      %463 = sbr.rel (0) target = $region21
    $region20: #{resnet_head_forward.1} parent=1 // pred_region
      _
    $region21: #{resnet_head_forward.1} parent=1 // pred_fallthru
      _
    // Predicated region
    $region22: #{resnet_head_forward.1} parent=1 // pred_check
      _
    $region23: #{resnet_head_forward.1} parent=1 // pred_check_branch
      %465 = sbr.rel (0) target = $region25
    $region24: #{resnet_head_forward.1} parent=1 // pred_region
      _
    $region25: #{resnet_head_forward.1} parent=1 // pred_fallthru
      _
    %466 = vsyncpa [#allocation3], 1

</llo_original>
